<compile_context>
chip_gen: v7x
topology: tpu7x:2x2x1
jax: 0.10.0
libtpu: 0.0.40
codegen_flags: <defaults>
</compile_context>

<pallas_src>
import functools

import jax
import jax.numpy as jnp
from jax import lax
from jax.experimental import pallas as pl
from jax.experimental.pallas import tpu as pltpu

LN_EPS = 1e-6          # norm_layer = partial(nn.LayerNorm, eps=1e-6)
_NEG_INF = -1e30       # finite "minus infinity" for key masking (avoids NaN)


@functools.lru_cache(maxsize=None)
def _vmem_limit():
    # Re-derive the scoped-VMEM cap per generation: ~96 MiB on v5e/v6e
    # (128 MiB physical), ~48 MiB on v7x (64 MiB physical).
    try:
        return int(pltpu.get_tpu_info().vmem_capacity_bytes * 3 // 4)
    except Exception:
        return 64 * 1024 * 1024


# ----------------------------- math helpers -----------------------------

def _gelu_tanh(x):
    # tanh-approximation GELU (EUP tanh instead of a long VALU polynomial).
    c = 0.7978845608028654  # sqrt(2/pi)
    return 0.5 * x * (1.0 + jnp.tanh(c * (x + 0.044715 * x * x * x)))


def _layernorm(x, w, b):
    mu = jnp.mean(x, axis=-1, keepdims=True)
    var = jnp.mean((x - mu) ** 2, axis=-1, keepdims=True)
    return (x - mu) / jnp.sqrt(var + LN_EPS) * w + b


def _bf16(x):
    return x.astype(jnp.bfloat16)


# ----------------------------- Pallas kernels -----------------------------

def _embed_tokens_kernel(bt, n_patch, n_tok, n_pad,
                         p_ref, w_ref, b_ref, cls_ref, pos_ref, o_ref):
    # p_ref:   (bt*P, K) bf16 patch vectors
    # w_ref:   (K, D) bf16  (Conv2d stride=kernel=patch as a matmul)
    # b_ref:   (1, D) f32 conv bias
    # cls_ref: (1, D) f32  == cls_token + pos_embed[0]   (pre-added on host)
    # pos_ref: (P, D) f32  == pos_embed[1:]
    # o_ref:   (bt*n_pad, D) f32 tokens, padded rows zeroed
    emb = jnp.dot(p_ref[...], w_ref[...],
                  preferred_element_type=jnp.float32) + b_ref[...]
    d = o_ref.shape[-1]
    n_extra = n_pad - n_tok
    for b in range(bt):                      # static, small
        r0 = b * n_pad                       # sublane-aligned (n_pad % 8 == 0)
        o_ref[r0:r0 + 1, :] = cls_ref[...]
        o_ref[r0 + 1:r0 + 1 + n_patch, :] = (
            emb[b * n_patch:(b + 1) * n_patch, :] + pos_ref[...])
        if n_extra:
            o_ref[r0 + n_tok:r0 + n_pad, :] = jnp.zeros((n_extra, d),
                                                        jnp.float32)


def _block_kernel(bt, n_pad, n_tok, num_heads, head_dim,
                  x_ref, ln1w_ref, ln1b_ref, qkvw_ref, qkvb_ref,
                  projw_ref, projb_ref, ln2w_ref, ln2b_ref,
                  fc1w_ref, fc1b_ref, fc2w_ref, fc2b_ref, o_ref):
    dim = num_heads * head_dim

    # Residual stream kept in f32.  Bt images are packed into one 2-D
    # (Mb, D) = (bt*n_pad, D) slab, sublane-aligned, no in-kernel concat.
    x = x_ref[...]

    # ---- attention ----
    h = _layernorm(x, ln1w_ref[...], ln1b_ref[...])
    # ONE fused (Mb, D) @ (D, 3D) matmul.  1/sqrt(head_dim) is pre-folded into
    # the q columns of qkv_w / qkv_b, so no scaling of scores in-kernel.
    qkv = jnp.dot(_bf16(h), qkvw_ref[...],
                  preferred_element_type=jnp.float32) + qkvb_ref[...]

    # key mask: tokens >= n_tok within each image are padding
    key_valid = lax.broadcasted_iota(jnp.int32, (n_pad, n_pad), 1) < n_tok

    att_rows = []
    for b in range(bt):                      # static, small (<= 4 images)
        r0 = b * n_pad                       # row offset, multiple of 8
        att_b = jnp.zeros((n_pad, dim), jnp.float32)
        for hh in range(num_heads):
            c0 = hh * head_dim
            q_h = _bf16(qkv[r0:r0 + n_pad, c0:c0 + head_dim])
            k_h = _bf16(qkv[r0:r0 + n_pad, dim + c0:dim + c0 + head_dim])
            v_h = _bf16(qkv[r0:r0 + n_pad,
                            2 * dim + c0:2 * dim + c0 + head_dim])
            # scores: (Np, hd) x (Np, hd) contracting hd -> (Np, Np)
            s = lax.dot_general(q_h, k_h, (((1,), (1,)), ((), ())),
                                preferred_element_type=jnp.float32)
            s = jnp.where(key_valid, s, _NEG_INF)
            s = s - jnp.max(s, axis=-1, keepdims=True)
            e = jnp.exp(s)
            p = e * pl.reciprocal(jnp.sum(e, axis=-1, keepdims=True),
                                  approx=True)
            ctx_h = jnp.dot(_bf16(p), v_h,
                            preferred_element_type=jnp.float32)     # (Np, hd)
            # Head folded straight into the output projection: accumulating
            # (Np, hd) @ (hd, D) over heads == concat-heads @ (D, D), with no
            # lane-axis concatenation / relayout and full-D output width.
            att_b = att_b + jnp.dot(_bf16(ctx_h), projw_ref[hh],
                                    preferred_element_type=jnp.float32)
        att_rows.append(att_b)
    att = att_rows[0] if bt == 1 else jnp.concatenate(att_rows, axis=0)
    x = x + att + projb_ref[...]

    # ---- mlp ----
    h2 = _layernorm(x, ln2w_ref[...], ln2b_ref[...])
    h2 = jnp.dot(_bf16(h2), fc1w_ref[...],
                 preferred_element_type=jnp.float32) + fc1b_ref[...]
    h2 = _gelu_tanh(h2)
    h2 = jnp.dot(_bf16(h2), fc2w_ref[...],
                 preferred_element_type=jnp.float32) + fc2b_ref[...]
    o_ref[...] = x + h2


def _cls_norm_kernel(x_ref, w_ref, b_ref, o_ref):
    # final LayerNorm on the CLS rows only (B, D); pre_logits = Identity
    o_ref[...] = _layernorm(x_ref[...], w_ref[...], b_ref[...])


# ----------------------------- kernel wrappers -----------------------------

def _pick_block_batch(batch):
    # keep >= 2 grid steps so the "parallel" axis can shard across v7x's 2 TCs
    target = max(batch // 2, 1)
    for cand in (8, 4, 2, 1):
        if cand <= target and batch % cand == 0:
            return cand
    return 1


def embed_tokens_pallas(patches2d, w, b, cls_row, pos_patch, *,
                        batch, n_patch, n_tok, n_pad, block_batch):
    k = patches2d.shape[1]
    d = w.shape[1]
    kernel = functools.partial(_embed_tokens_kernel, block_batch, n_patch,
                               n_tok, n_pad)
    consts = (w, b, cls_row, pos_patch)
    const_specs = [pl.BlockSpec(c.shape, lambda i, nd=c.ndim: (0,) * nd)
                   for c in consts]
    return pl.pallas_call(
        kernel,
        out_shape=jax.ShapeDtypeStruct((batch * n_pad, d), jnp.float32),
        grid=(batch // block_batch,),
        in_specs=[pl.BlockSpec((block_batch * n_patch, k), lambda i: (i, 0))]
                 + const_specs,
        out_specs=pl.BlockSpec((block_batch * n_pad, d), lambda i: (i, 0)),
        compiler_params=pltpu.CompilerParams(
            dimension_semantics=("parallel",),
            vmem_limit_bytes=_vmem_limit()),
    )(patches2d, *consts)


def block_pallas(tok2d, p, *, batch, n_pad, n_tok, num_heads, block_batch):
    m, d = tok2d.shape
    head_dim = d // num_heads
    weights = (p["ln1_w"], p["ln1_b"], p["qkv_w"], p["qkv_b"],
               p["proj_w"], p["proj_b"], p["ln2_w"], p["ln2_b"],
               p["fc1_w"], p["fc1_b"], p["fc2_w"], p["fc2_b"])
    # constant index maps -> weights fetched once, VMEM-resident across steps
    w_specs = [pl.BlockSpec(w.shape, lambda i, nd=w.ndim: (0,) * nd)
               for w in weights]
    mb = block_batch * n_pad
    kernel = functools.partial(_block_kernel, block_batch, n_pad, n_tok,
                               num_heads, head_dim)
    return pl.pallas_call(
        kernel,
        out_shape=jax.ShapeDtypeStruct((m, d), jnp.float32),
        grid=(batch // block_batch,),
        in_specs=[pl.BlockSpec((mb, d), lambda i: (i, 0))] + w_specs,
        out_specs=pl.BlockSpec((mb, d), lambda i: (i, 0)),
        compiler_params=pltpu.CompilerParams(
            dimension_semantics=("parallel",),
            vmem_limit_bytes=_vmem_limit()),
    )(tok2d, *weights)


def cls_norm_pallas(cls_tokens, w, b):
    # cls_tokens: (B, D) f32 -- only the CLS rows are DMA'd, not (B, N, D)
    return pl.pallas_call(
        _cls_norm_kernel,
        out_shape=jax.ShapeDtypeStruct(cls_tokens.shape, jnp.float32),
    )(cls_tokens, w, b)


# ----------------------------- glue / params -----------------------------

def extract_patches(x_nchw, patch_size):
    # Unfold NCHW image into (B, num_patches, C*p*p) with (C, ph, pw) flatten
    # order, matching Conv2d(in, embed, kernel=p, stride=p) + flatten(2).T(1,2)
    b, c, hh, ww = x_nchw.shape
    p = patch_size
    gh, gw = hh // p, ww // p
    x = x_nchw.reshape(b, c, gh, p, gw, p)
    x = jnp.transpose(x, (0, 2, 4, 1, 3, 5))      # (B, gh, gw, C, p, p)
    return x.reshape(b, gh * gw, c * p * p)


def init_params(key, *, in_chans, patch_size, embed_dim, depth, num_heads,
                mlp_ratio, num_patches):
    # Torch-layout f32 parameters (linear weights pre-transposed to (in, out)).
    # Per _init_vit_weights default path: linear weights trunc_normal(0.02)
    # (approximated by normal*0.02, synthetic), biases zero, LN weight=1 bias=0.
    del num_heads
    d = embed_dim
    hidden = int(d * mlp_ratio)
    kk = patch_size * patch_size * in_chans
    keys = jax.random.split(key, 3 + depth)
    std = 0.02
    params = {
        "patch_w": std * jax.random.normal(keys[0], (kk, d), jnp.float32),
        "patch_b": jnp.zeros((d,), jnp.float32),
        "cls_token": std * jax.random.normal(keys[1], (1, 1, d), jnp.float32),
        "pos_embed": std * jax.random.normal(keys[2], (1, num_patches + 1, d),
                                             jnp.float32),
        "norm_w": jnp.ones((d,), jnp.float32),
        "norm_b": jnp.zeros((d,), jnp.float32),
        "blocks": [],
    }
    for li in range(depth):
        bk = jax.random.split(keys[3 + li], 4)
        params["blocks"].append({
            "ln1_w": jnp.ones((d,), jnp.float32),
            "ln1_b": jnp.zeros((d,), jnp.float32),
            "qkv_w": std * jax.random.normal(bk[0], (d, 3 * d), jnp.float32),
            "qkv_b": jnp.zeros((3 * d,), jnp.float32),   # qkv_bias=True, init 0
            "proj_w": std * jax.random.normal(bk[1], (d, d), jnp.float32),
            "proj_b": jnp.zeros((d,), jnp.float32),
            "ln2_w": jnp.ones((d,), jnp.float32),
            "ln2_b": jnp.zeros((d,), jnp.float32),
            "fc1_w": std * jax.random.normal(bk[2], (d, hidden), jnp.float32),
            "fc1_b": jnp.zeros((hidden,), jnp.float32),
            "fc2_w": std * jax.random.normal(bk[3], (hidden, d), jnp.float32),
            "fc2_b": jnp.zeros((d,), jnp.float32),
        })
    return params


def prepare_kernel_params(params, *, num_heads):
    # Kernel-side layout: bf16 matmul weights, (1, X) f32 biases/norms,
    # attention scale folded into q, proj_w reshaped (H, hd, D), cls+pos fused.
    d = params["pos_embed"].shape[-1]
    hd = d // num_heads
    scale = hd ** -0.5
    bf16 = jnp.bfloat16
    kp = {
        "patch_w": params["patch_w"].astype(bf16),
        "patch_b": params["patch_b"].reshape(1, d),
        "cls_row": (params["cls_token"][0]
                    + params["pos_embed"][0, :1]).reshape(1, d),
        "pos_patch": params["pos_embed"][0, 1:],                   # (P, D)
        "norm_w": params["norm_w"].reshape(1, d),
        "norm_b": params["norm_b"].reshape(1, d),
        "blocks": [],
    }
    qscale = jnp.concatenate([jnp.full((d,), scale, jnp.float32),
                              jnp.ones((2 * d,), jnp.float32)])
    for p in params["blocks"]:
        hidden = p["fc1_w"].shape[1]
        kp["blocks"].append({
            "ln1_w": p["ln1_w"].reshape(1, d),
            "ln1_b": p["ln1_b"].reshape(1, d),
            "qkv_w": (p["qkv_w"] * qscale[None, :]).astype(bf16),
            "qkv_b": (p["qkv_b"] * qscale).reshape(1, 3 * d),
            "proj_w": p["proj_w"].reshape(num_heads, hd, d).astype(bf16),
            "proj_b": p["proj_b"].reshape(1, d),
            "ln2_w": p["ln2_w"].reshape(1, d),
            "ln2_b": p["ln2_b"].reshape(1, d),
            "fc1_w": p["fc1_w"].astype(bf16),
            "fc1_b": p["fc1_b"].reshape(1, hidden),
            "fc2_w": p["fc2_w"].astype(bf16),
            "fc2_b": p["fc2_b"].reshape(1, d),
        })
    return kp


def vit_forward(x_img, params, *, patch_size, num_heads):
    b = x_img.shape[0]
    kp = prepare_kernel_params(params, num_heads=num_heads)
    patches = extract_patches(x_img, patch_size)              # (B, P, K)
    _, n_patch, k = patches.shape
    d = kp["patch_w"].shape[1]
    n_tok = n_patch + 1
    n_pad = ((n_tok + 7) // 8) * 8           # sublane-aligned token count
    bt = _pick_block_batch(b)

    # patch embed + cls token + pos embed fused; emits padded 2-D token slab
    tok = embed_tokens_pallas(
        patches.reshape(b * n_patch, k).astype(jnp.bfloat16),
        kp["patch_w"], kp["patch_b"], kp["cls_row"], kp["pos_patch"],
        batch=b, n_patch=n_patch, n_tok=n_tok, n_pad=n_pad, block_batch=bt)

    for blk in kp["blocks"]:                 # pos_drop/drop_path p=0 -> identity
        tok = block_pallas(tok, blk, batch=b, n_pad=n_pad, n_tok=n_tok,
                           num_heads=num_heads, block_batch=bt)

    cls = tok.reshape(b, n_pad, d)[:, 0, :]
    return cls_norm_pallas(cls, kp["norm_w"], kp["norm_b"])


# ----------------------------- pure-JAX f32 reference -----------------------------

def vit_reference(x_img, params, *, patch_size, num_heads):
    def ln(v, w, b):
        mu = v.mean(-1, keepdims=True)
        var = ((v - mu) ** 2).mean(-1, keepdims=True)
        return (v - mu) / jnp.sqrt(var + LN_EPS) * w + b

    bsz = x_img.shape[0]
    patches = extract_patches(x_img, patch_size)
    x = patches @ params["patch_w"] + params["patch_b"]
    d = x.shape[-1]
    hd = d // num_heads
    cls = jnp.broadcast_to(params["cls_token"], (bsz, 1, d))
    x = jnp.concatenate([cls, x], axis=1) + params["pos_embed"]
    n = x.shape[1]
    for p in params["blocks"]:
        h = ln(x, p["ln1_w"], p["ln1_b"])
        qkv = (h @ p["qkv_w"] + p["qkv_b"]).reshape(bsz, n, 3, num_heads, hd)
        qkv = jnp.transpose(qkv, (2, 0, 3, 1, 4))
        q, k_, v = qkv[0], qkv[1], qkv[2]                      # (B, H, N, hd)
        s = jnp.einsum("bhnk,bhmk->bhnm", q, k_) * hd ** -0.5
        a = jax.nn.softmax(s, axis=-1)
        ctx = jnp.einsum("bhnm,bhmk->bhnk", a, v)
        ctx = jnp.transpose(ctx, (0, 2, 1, 3)).reshape(bsz, n, d)
        x = x + (ctx @ p["proj_w"] + p["proj_b"])
        h2 = ln(x, p["ln2_w"], p["ln2_b"])
        h2 = jax.nn.gelu(h2 @ p["fc1_w"] + p["fc1_b"], approximate=False)
        x = x + (h2 @ p["fc2_w"] + p["fc2_b"])
    x = ln(x, params["norm_w"], params["norm_b"])
    return x[:, 0]


# ----------------------------- main -----------------------------

if __name__ == "__main__":
    B, C, H, W = 2, 4, 16, 16
    patch_size = 4
    embed_dim = 32
    depth = 2
    num_heads = 4
    mlp_ratio = 4.0
    num_patches = (H // patch_size) * (W // patch_size)   # 16 -> N = 17 tokens

    key = jax.random.PRNGKey(0)
    pkey, xkey = jax.random.split(key)
    params = init_params(pkey, in_chans=C, patch_size=patch_size,
                         embed_dim=embed_dim, depth=depth, num_heads=num_heads,
                         mlp_ratio=mlp_ratio, num_patches=num_patches)
    x = jax.random.normal(xkey, (B, C, H, W), jnp.float32)

    out = jax.block_until_ready(
        vit_forward(x, params, patch_size=patch_size, num_heads=num_heads))

    with jax.default_matmul_precision("highest"):
        ref = jax.block_until_ready(
            vit_reference(x, params, patch_size=patch_size,
                          num_heads=num_heads))

    assert out.shape == (B, embed_dim), out.shape
    # Kernel deliberately uses bf16 matmul operands (f32 accumulate), approx
    # reciprocal softmax and tanh-GELU; tolerance reflects that mixed precision
    # versus the all-f32 / exact-erf reference.
    if not jnp.allclose(out, ref, atol=2e-2, rtol=2e-2):
        raise AssertionError(
            f"mismatch: max |diff| = {float(jnp.max(jnp.abs(out - ref)))}")
    print("KERNEL_OK")
</pallas_src>

<mosaic_0001>
module attributes {stable_mosaic.version = 11 : i64} {
  func.func @_embed_tokens_kernel(%arg0: i32, %arg1: memref<16x64xbf16, #tpu.memory_space<vmem>>, %arg2: memref<64x32xbf16, #tpu.memory_space<vmem>>, %arg3: memref<1x32xf32, #tpu.memory_space<vmem>>, %arg4: memref<1x32xf32, #tpu.memory_space<vmem>>, %arg5: memref<16x32xf32, #tpu.memory_space<vmem>>, %arg6: memref<24x32xf32, #tpu.memory_space<vmem>>) attributes {dimension_semantics = [#tpu.dimension_semantics<parallel>], iteration_bounds = array<i64: 2>, scalar_prefetch = 0 : i64, scratch_operands = 0 : i64, tpu.core_type = #tpu.core_type<tc>, window_params = [{transform_indices = @transform_0, window_bounds = array<i64: 16, 64>}, {pipeline_mode = #tpu.pipeline_mode<synchronous>, transform_indices = @transform_1, window_bounds = array<i64: 64, 32>}, {pipeline_mode = #tpu.pipeline_mode<synchronous>, transform_indices = @transform_2, window_bounds = array<i64: 1, 32>}, {pipeline_mode = #tpu.pipeline_mode<synchronous>, transform_indices = @transform_3, window_bounds = array<i64: 1, 32>}, {pipeline_mode = #tpu.pipeline_mode<synchronous>, transform_indices = @transform_4, window_bounds = array<i64: 16, 32>}, {transform_indices = @transform_5, window_bounds = array<i64: 24, 32>}]} {
    %c0 = arith.constant 0 : index
    %c0_0 = arith.constant 0 : index
    %0 = vector.load %arg1[%c0, %c0_0] : memref<16x64xbf16, #tpu.memory_space<vmem>>, vector<16x64xbf16>
    %c0_1 = arith.constant 0 : index
    %c0_2 = arith.constant 0 : index
    %1 = vector.load %arg2[%c0_1, %c0_2] : memref<64x32xbf16, #tpu.memory_space<vmem>>, vector<64x32xbf16>
    %cst = arith.constant dense<0.000000e+00> : vector<16x32xf32>
    %2 = tpu.matmul %0, %1, %cst {dimension_numbers = #tpu.dot_dimension_numbers<[1], [0], [0], [1], [0, 0, 1, 1], [], []>} : vector<16x64xbf16>, vector<64x32xbf16>, vector<16x32xf32> -> vector<16x32xf32>
    %c0_3 = arith.constant 0 : index
    %c0_4 = arith.constant 0 : index
    %3 = vector.load %arg3[%c0_3, %c0_4] : memref<1x32xf32, #tpu.memory_space<vmem>>, vector<1x32xf32>
    %4 = vector.broadcast %3 : vector<1x32xf32> to vector<16x32xf32>
    %5 = arith.addf %2, %4 : vector<16x32xf32>
    %c0_5 = arith.constant 0 : index
    %c0_6 = arith.constant 0 : index
    %6 = vector.load %arg4[%c0_5, %c0_6] : memref<1x32xf32, #tpu.memory_space<vmem>>, vector<1x32xf32>
    %c0_7 = arith.constant 0 : index
    %c0_8 = arith.constant 0 : index
    %7 = vector.load %arg6[%c0_7, %c0_8] : memref<24x32xf32, #tpu.memory_space<vmem>>, vector<1x32xf32>
    tpu.vector_store %arg6[%c0_7, %c0_8], %6 {strides = array<i32>} : memref<24x32xf32, #tpu.memory_space<vmem>>, vector<1x32xf32>,
    %c0_9 = arith.constant 0 : index
    %c0_10 = arith.constant 0 : index
    %8 = vector.load %arg5[%c0_9, %c0_10] : memref<16x32xf32, #tpu.memory_space<vmem>>, vector<16x32xf32>
    %9 = arith.addf %5, %8 : vector<16x32xf32>
    %c1 = arith.constant 1 : index
    %c0_11 = arith.constant 0 : index
    %10 = vector.load %arg6[%c1, %c0_11] : memref<24x32xf32, #tpu.memory_space<vmem>>, vector<16x32xf32>
    tpu.vector_store %arg6[%c1, %c0_11], %9 {strides = array<i32>} : memref<24x32xf32, #tpu.memory_space<vmem>>, vector<16x32xf32>,
    %cst_12 = arith.constant 0.000000e+00 : f32
    %11 = vector.broadcast %cst_12 : f32 to vector<7x32xf32>
    %c17 = arith.constant 17 : index
    %c0_13 = arith.constant 0 : index
    %12 = vector.load %arg6[%c17, %c0_13] : memref<24x32xf32, #tpu.memory_space<vmem>>, vector<7x32xf32>
    tpu.vector_store %arg6[%c17, %c0_13], %11 {strides = array<i32>} : memref<24x32xf32, #tpu.memory_space<vmem>>, vector<7x32xf32>,
    return
  }
  func.func @transform_0(%arg0: i32) -> (i32, i32) {
    %c0_i32 = arith.constant 0 : i32
    %c0_i32_0 = arith.constant 0 : i32
    return %arg0, %c0_i32 : i32, i32
  }
  func.func @transform_1(%arg0: i32) -> (i32, i32) {
    %c0_i32 = arith.constant 0 : i32
    %c0_i32_0 = arith.constant 0 : i32
    %c0_i32_1 = arith.constant 0 : i32
    return %c0_i32, %c0_i32_0 : i32, i32
  }
  func.func @transform_2(%arg0: i32) -> (i32, i32) {
    %c0_i32 = arith.constant 0 : i32
    %c0_i32_0 = arith.constant 0 : i32
    %c0_i32_1 = arith.constant 0 : i32
    return %c0_i32, %c0_i32_0 : i32, i32
  }
  func.func @transform_3(%arg0: i32) -> (i32, i32) {
    %c0_i32 = arith.constant 0 : i32
    %c0_i32_0 = arith.constant 0 : i32
    %c0_i32_1 = arith.constant 0 : i32
    return %c0_i32, %c0_i32_0 : i32, i32
  }
  func.func @transform_4(%arg0: i32) -> (i32, i32) {
    %c0_i32 = arith.constant 0 : i32
    %c0_i32_0 = arith.constant 0 : i32
    %c0_i32_1 = arith.constant 0 : i32
    return %c0_i32, %c0_i32_0 : i32, i32
  }
  func.func @transform_5(%arg0: i32) -> (i32, i32) {
    %c0_i32 = arith.constant 0 : i32
    %c0_i32_0 = arith.constant 0 : i32
    return %arg0, %c0_i32 : i32, i32
  }
}

</mosaic_0001>

<llo_original>
// kernel: tpu_custom_call.1
$region0: #{tpu_custom_call.1}
  #allocation0 [shape = 'u32[]', space=smem, size = 0x4, offset = 0x4, fixed_abs, tag = 'smem constant byte address 0x4 - core index']
  #allocation1 [shape = 'u32[144,128]{1,0:T(1,128)}', space=vmem, size = 0x12000, scoped, tag = 'internal scratch']
  %s0 = inlined_call_operand.hbm [shape: bf16[32,64], index: 0, kind: input, shape index: {}]
  %s1 = inlined_call_operand.hbm [shape: bf16[64,32], index: 1, kind: input, shape index: {}]
  %s2 = inlined_call_operand.hbm [shape: f32[1,32], index: 2, kind: input, shape index: {}]
  %s3 = inlined_call_operand.hbm [shape: f32[1,32], index: 3, kind: input, shape index: {}]
  %s4 = inlined_call_operand.hbm [shape: f32[16,32], index: 4, kind: input, shape index: {}]
  %s5 = inlined_call_operand.hbm [shape: f32[48,32], index: 5, kind: output, shape index: {}]
  %s6 = sld [smem:[#allocation0]]
  $region73: #{tpu_custom_call.1} parent=0
    _
  %s8 = ssub.s32 1, %s6
  %s9 = scalar_select 0, %s8, %s6
  $region1: #{tpu_custom_call.1} parent=0
    #allocation2 [shape = 'u8[8192]{0}', space=vmem, size = 0x2000, scoped, tag = 'input window, operand 0']
    #allocation3 [shape = 's32[2]{0}', space=sflag, size = 0x8, scoped, tag = 'scoped memory for tpu_custom_call.1']
    #allocation4 [shape = 's32[2]{0}', space=sflag, size = 0x8, scoped, tag = 'scoped memory for tpu_custom_call.1']
    #allocation5 [shape = 'u8[16384]{0}', space=vmem, size = 0x4000, scoped, tag = 'input window, operand 1, single buffered']
    #allocation6 [shape = 's32[1]{0}', space=sflag, size = 0x4, scoped, tag = 'scoped memory for tpu_custom_call.1']
    #allocation7 [shape = 'u8[512]{0}', space=vmem, size = 0x400, scoped, tag = 'input window, operand 2, single buffered']
    #allocation8 [shape = 'u8[512]{0}', space=vmem, size = 0x400, scoped, tag = 'input window, operand 3, single buffered']
    #allocation9 [shape = 's32[1]{0}', space=sflag, size = 0x4, scoped, tag = 'scoped memory for tpu_custom_call.1']
    #allocation10 [shape = 'u8[8192]{0}', space=vmem, size = 0x2000, scoped, tag = 'input window, operand 4, single buffered']
    #allocation11 [shape = 'u8[24576]{0}', space=vmem, size = 0x6000, scoped, tag = 'output window, operand 0']
    %10 = vsyncpa [#allocation3], 0
    %s11 = scalar_lea.sflag [#allocation3], 1
    %12 = vsyncpa %s11, 0
    %13 = vsyncpa [#allocation6], 0
    %14 = vsyncpa [#allocation9], 0
    %15 = vsyncpa [#allocation4], 0
    %s16 = scalar_lea.sflag [#allocation4], 1
    %17 = vsyncpa %s16, 0
    loop: start=0, step=1, limit=4
    $region2: #{tpu_custom_call.1} parent=1 // loop_pre_header
      _
    $region3: #{tpu_custom_call.1} parent=1 // loop_header
      %s19 = sphi 0, %s23
      %p20 = scmp.ge.s32.totalorder %s19, 4
      %s29 = sphi 0, %s31
      %s32 = sphi 0, %s29
      %s33 = sphi 0, %s32
      %s49 = sphi 0, %s33
      %s53 = sphi 0, %s53
      %s55 = sphi 0, %s53
      %s56 = sphi 0, %s55
      %s70 = sphi 0, %s56
      %s74 = sphi 0, %s74
      %s76 = sphi 0, %s74
      %s77 = sphi 0, %s76
      %s91 = sphi 0, %s77
      %s95 = sphi 0, %s95
      %s97 = sphi 0, %s95
      %s98 = sphi 0, %s97
      %s112 = sphi 0, %s98
      %s116 = sphi 0, %s116
      %s118 = sphi 0, %s116
      %s119 = sphi 0, %s118
      %s133 = sphi 0, %s119
      %s139 = sphi 0, %s141
      %s142 = sphi 0, %s139
      %s143 = sphi 0, %s142
      %s159 = sphi 0, %s143
    $region4: #{tpu_custom_call.1} parent=1 // loop_header_branch
      %22 = sbr.rel (%p20) target = $region8
    $region5: #{tpu_custom_call.1} parent=1 // loop_body
      %s24 = ssub.s32 %s19, 1
      %s25 = ssub.s32 %s19, 2
      %s26 = sadd.s32 %s19, 1
      %s27 = ssub.s32 %s19, %s26
      %p28 = scmp.eq.s32.totalorder %s27, 0
      %s30 = sadd.s32 %s29, 1
      %s31 = scalar_select %p28, %s29, %s30
      %p34 = pneg %p28
      %p35 = scmp.eq.s32.totalorder %s19, 1
      %p36 = por %p34, %p35
      %p37 = scmp.ne.s32.totalorder %s29, %s32
      %p38 = scmp.eq.s32.totalorder %s19, 0
      %p39 = por %p37, %p38
      %p40 = scmp.ne.s32.totalorder %s29, %s32
      %p41 = scmp.eq.s32.totalorder %s24, 1
      %p42 = por %p40, %p41
      %p43 = scmp.ne.s32.totalorder %s32, %s33
      %p44 = scmp.eq.s32.totalorder %s24, 0
      %p45 = por %p43, %p44
      %p46 = scmp.ne.s32.totalorder %s32, %s33
      %p47 = scmp.eq.s32.totalorder %s25, 1
      %p48 = por %p46, %p47
      %p50 = scmp.ne.s32.totalorder %s33, %s49
      %p51 = scmp.eq.s32.totalorder %s25, 0
      %p52 = por %p50, %p51
      %s54 = sadd.s32 %s53, 1
      %p57 = scmp.eq.s32.totalorder %s19, 1
      %p58 = scmp.ne.s32.totalorder %s53, %s55
      %p59 = scmp.eq.s32.totalorder %s19, 0
      %p60 = por %p58, %p59
      %p61 = scmp.ne.s32.totalorder %s53, %s55
      %p62 = scmp.eq.s32.totalorder %s24, 1
      %p63 = por %p61, %p62
      %p64 = scmp.ne.s32.totalorder %s55, %s56
      %p65 = scmp.eq.s32.totalorder %s24, 0
      %p66 = por %p64, %p65
      %p67 = scmp.ne.s32.totalorder %s55, %s56
      %p68 = scmp.eq.s32.totalorder %s25, 1
      %p69 = por %p67, %p68
      %p71 = scmp.ne.s32.totalorder %s56, %s70
      %p72 = scmp.eq.s32.totalorder %s25, 0
      %p73 = por %p71, %p72
      %s75 = sadd.s32 %s74, 1
      %p78 = scmp.eq.s32.totalorder %s19, 1
      %p79 = scmp.ne.s32.totalorder %s74, %s76
      %p80 = scmp.eq.s32.totalorder %s19, 0
      %p81 = por %p79, %p80
      %p82 = scmp.ne.s32.totalorder %s74, %s76
      %p83 = scmp.eq.s32.totalorder %s24, 1
      %p84 = por %p82, %p83
      %p85 = scmp.ne.s32.totalorder %s76, %s77
      %p86 = scmp.eq.s32.totalorder %s24, 0
      %p87 = por %p85, %p86
      %p88 = scmp.ne.s32.totalorder %s76, %s77
      %p89 = scmp.eq.s32.totalorder %s25, 1
      %p90 = por %p88, %p89
      %p92 = scmp.ne.s32.totalorder %s77, %s91
      %p93 = scmp.eq.s32.totalorder %s25, 0
      %p94 = por %p92, %p93
      %s96 = sadd.s32 %s95, 1
      %p99 = scmp.eq.s32.totalorder %s19, 1
      %p100 = scmp.ne.s32.totalorder %s95, %s97
      %p101 = scmp.eq.s32.totalorder %s19, 0
      %p102 = por %p100, %p101
      %p103 = scmp.ne.s32.totalorder %s95, %s97
      %p104 = scmp.eq.s32.totalorder %s24, 1
      %p105 = por %p103, %p104
      %p106 = scmp.ne.s32.totalorder %s97, %s98
      %p107 = scmp.eq.s32.totalorder %s24, 0
      %p108 = por %p106, %p107
      %p109 = scmp.ne.s32.totalorder %s97, %s98
      %p110 = scmp.eq.s32.totalorder %s25, 1
      %p111 = por %p109, %p110
      %p113 = scmp.ne.s32.totalorder %s98, %s112
      %p114 = scmp.eq.s32.totalorder %s25, 0
      %p115 = por %p113, %p114
      %s117 = sadd.s32 %s116, 1
      %p120 = scmp.eq.s32.totalorder %s19, 1
      %p121 = scmp.ne.s32.totalorder %s116, %s118
      %p122 = scmp.eq.s32.totalorder %s19, 0
      %p123 = por %p121, %p122
      %p124 = scmp.ne.s32.totalorder %s116, %s118
      %p125 = scmp.eq.s32.totalorder %s24, 1
      %p126 = por %p124, %p125
      %p127 = scmp.ne.s32.totalorder %s118, %s119
      %p128 = scmp.eq.s32.totalorder %s24, 0
      %p129 = por %p127, %p128
      %p130 = scmp.ne.s32.totalorder %s118, %s119
      %p131 = scmp.eq.s32.totalorder %s25, 1
      %p132 = por %p130, %p131
      %p134 = scmp.ne.s32.totalorder %s119, %s133
      %p135 = scmp.eq.s32.totalorder %s25, 0
      %p136 = por %p134, %p135
      %s137 = ssub.s32 %s19, %s26
      %p138 = scmp.eq.s32.totalorder %s137, 0
      %s140 = sadd.s32 %s139, 1
      %s141 = scalar_select %p138, %s139, %s140
      %p144 = pneg %p138
      %p145 = scmp.eq.s32.totalorder %s19, 1
      %p146 = por %p144, %p145
      %p147 = scmp.ne.s32.totalorder %s139, %s142
      %p148 = scmp.eq.s32.totalorder %s19, 0
      %p149 = por %p147, %p148
      %p150 = scmp.ne.s32.totalorder %s139, %s142
      %p151 = scmp.eq.s32.totalorder %s24, 1
      %p152 = por %p150, %p151
      %p153 = scmp.ne.s32.totalorder %s142, %s143
      %p154 = scmp.eq.s32.totalorder %s24, 0
      %p155 = por %p153, %p154
      %p156 = scmp.ne.s32.totalorder %s142, %s143
      %p157 = scmp.eq.s32.totalorder %s25, 1
      %p158 = por %p156, %p157
      %p160 = scmp.ne.s32.totalorder %s143, %s159
      %p161 = scmp.eq.s32.totalorder %s25, 0
      %p162 = por %p160, %p161
      %p163 = scmp.le.s32.totalorder 1, %s19
      %p164 = scmp.lt.s32.totalorder %s19, 3
      %p165 = pnand %p163, %p164
      %p166 = pneg %p165
      // Predicated region
      $region9: #{tpu_custom_call.1} parent=5 // pred_check
        _
      $region10: #{tpu_custom_call.1} parent=5 // pred_check_branch
        %168 = sbr.rel (%p165) target = $region12
      $region11: #{tpu_custom_call.1} parent=5 // pred_region
        %s169 = ssub.s32 %s19, 1
        // Predicated region
        $region13: #{tpu_custom_call.1} parent=11 // pred_check
          %p170 = pneg %p66
        $region14: #{tpu_custom_call.1} parent=11 // pred_check_branch
          %172 = sbr.rel (%p170) target = $region16
        $region15: #{tpu_custom_call.1} parent=11 // pred_region
          %s174 = ssub.s32 512, 512
          %175 = vsyncadd [#allocation6], %s174
          %s176 = sshll.u32 [#allocation5], 4
          %s177 = int_to_ptr.vmem [resolvable:$true] %s176
          %182 = dma.hbm_to_vmem [thread:$0]  %s1, 512, %s177, [#allocation6], 64, 64, 4
        $region16: #{tpu_custom_call.1} parent=11 // pred_fallthru
          _
        // Predicated region
        $region17: #{tpu_custom_call.1} parent=11 // pred_check
          %p183 = pneg %p87
        $region18: #{tpu_custom_call.1} parent=11 // pred_check_branch
          %185 = sbr.rel (%p183) target = $region20
        $region19: #{tpu_custom_call.1} parent=11 // pred_region
          %s187 = ssub.s32 16, 16
          %188 = vsyncadd [#allocation6], %s187
          %s190 = sshll.u32 [#allocation7], 4
          %s191 = int_to_ptr.vmem [resolvable:$true] %s190
          %193 = dma.hbm_to_vmem [thread:$0]  %s2, 16, %s191, [#allocation6]
        $region20: #{tpu_custom_call.1} parent=11 // pred_fallthru
          _
        // Predicated region
        $region21: #{tpu_custom_call.1} parent=11 // pred_check
          %p194 = pneg %p108
        $region22: #{tpu_custom_call.1} parent=11 // pred_check_branch
          %196 = sbr.rel (%p194) target = $region24
        $region23: #{tpu_custom_call.1} parent=11 // pred_region
          %s198 = ssub.s32 16, 16
          %199 = vsyncadd [#allocation9], %s198
          %s201 = sshll.u32 [#allocation8], 4
          %s202 = int_to_ptr.vmem [resolvable:$true] %s201
          %204 = dma.hbm_to_vmem [thread:$0]  %s3, 16, %s202, [#allocation9]
        $region24: #{tpu_custom_call.1} parent=11 // pred_fallthru
          _
        // Predicated region
        $region25: #{tpu_custom_call.1} parent=11 // pred_check
          %p205 = pneg %p129
        $region26: #{tpu_custom_call.1} parent=11 // pred_check_branch
          %207 = sbr.rel (%p205) target = $region28
        $region27: #{tpu_custom_call.1} parent=11 // pred_region
          %s209 = ssub.s32 256, 256
          %210 = vsyncadd [#allocation9], %s209
          %s211 = sshll.u32 [#allocation10], 4
          %s212 = int_to_ptr.vmem [resolvable:$true] %s211
          %217 = dma.hbm_to_vmem [thread:$0]  %s4, 256, %s212, [#allocation9], 128, 128, 8
        $region28: #{tpu_custom_call.1} parent=11 // pred_fallthru
          _
      $region12: #{tpu_custom_call.1} parent=5 // pred_fallthru
        _
      %p218 = scmp.lt.s32.totalorder %s19, 2
      // Predicated region
      $region29: #{tpu_custom_call.1} parent=5 // pred_check
        %p219 = pneg %p218
      $region30: #{tpu_custom_call.1} parent=5 // pred_check_branch
        %221 = sbr.rel (%p219) target = $region32
      $region31: #{tpu_custom_call.1} parent=5 // pred_region
        // Predicated region
        $region33: #{tpu_custom_call.1} parent=31 // pred_check
          %p222 = pneg %p39
        $region34: #{tpu_custom_call.1} parent=31 // pred_check_branch
          %224 = sbr.rel (%p222) target = $region36
        $region35: #{tpu_custom_call.1} parent=31 // pred_region
          %s225 = sand.u32 %s29, 1
          %s226 = scalar_lea.sflag [#allocation3], %s225
          %s227 = sand.u32 %s29, 1
          %s228 = smul.addr %s227, 8
          %s229 = scalar_lea.vmem [#allocation2], %s228
          %s230 = smul.u32 2, %s19
          %s232 = ssub.s32 128, 128
          %233 = vsyncadd %s226, %s232
          %s234 = smul.addr %s230, 64
          %s235 = scalar_lea.hbm %s0, %s234
          %s236 = sshll.u32 %s229, 4
          %s237 = int_to_ptr.vmem [resolvable:$true] %s236
          %242 = dma.hbm_to_vmem [thread:$0]  %s235, 128, %s237, %s226, 64, 64, 4
        $region36: #{tpu_custom_call.1} parent=31 // pred_fallthru
          _
      $region32: #{tpu_custom_call.1} parent=5 // pred_fallthru
        _
      %p243 = scmp.le.s32.totalorder 1, %s19
      %p244 = scmp.lt.s32.totalorder %s19, 3
      %p245 = pnand %p243, %p244
      %p246 = pneg %p245
      // Predicated region
      $region37: #{tpu_custom_call.1} parent=5 // pred_check
        _
      $region38: #{tpu_custom_call.1} parent=5 // pred_check_branch
        %248 = sbr.rel (%p245) target = $region40
      $region39: #{tpu_custom_call.1} parent=5 // pred_region
        %s249 = ssub.s32 %s19, 1
        %s250 = sand.u32 %s32, 1
        %s251 = scalar_lea.sflag [#allocation3], %s250
        %s252 = sand.u32 %s32, 1
        %s253 = smul.addr %s252, 8
        %s254 = scalar_lea.vmem [#allocation2], %s253
        // Predicated region
        $region41: #{tpu_custom_call.1} parent=39 // pred_check
          %p255 = pneg %p45
        $region42: #{tpu_custom_call.1} parent=39 // pred_check_branch
          %257 = sbr.rel (%p255) target = $region44
        $region43: #{tpu_custom_call.1} parent=39 // pred_region
          %258 = dma.done %s251, 128
        $region44: #{tpu_custom_call.1} parent=39 // pred_fallthru
          _
        // Predicated region
        $region45: #{tpu_custom_call.1} parent=39 // pred_check
          %p259 = pneg %p66
        $region46: #{tpu_custom_call.1} parent=39 // pred_check_branch
          %261 = sbr.rel (%p259) target = $region48
        $region47: #{tpu_custom_call.1} parent=39 // pred_region
          %262 = dma.done [#allocation6], 512
        $region48: #{tpu_custom_call.1} parent=39 // pred_fallthru
          _
        // Predicated region
        $region49: #{tpu_custom_call.1} parent=39 // pred_check
          %p263 = pneg %p87
        $region50: #{tpu_custom_call.1} parent=39 // pred_check_branch
          %265 = sbr.rel (%p263) target = $region52
        $region51: #{tpu_custom_call.1} parent=39 // pred_region
          %266 = dma.done [#allocation6], 16
        $region52: #{tpu_custom_call.1} parent=39 // pred_fallthru
          _
        // Predicated region
        $region53: #{tpu_custom_call.1} parent=39 // pred_check
          %p267 = pneg %p108
        $region54: #{tpu_custom_call.1} parent=39 // pred_check_branch
          %269 = sbr.rel (%p267) target = $region56
        $region55: #{tpu_custom_call.1} parent=39 // pred_region
          %270 = dma.done [#allocation9], 16
        $region56: #{tpu_custom_call.1} parent=39 // pred_fallthru
          _
        // Predicated region
        $region57: #{tpu_custom_call.1} parent=39 // pred_check
          %p271 = pneg %p129
        $region58: #{tpu_custom_call.1} parent=39 // pred_check_branch
          %273 = sbr.rel (%p271) target = $region60
        $region59: #{tpu_custom_call.1} parent=39 // pred_region
          %274 = dma.done [#allocation9], 256
        $region60: #{tpu_custom_call.1} parent=39 // pred_fallthru
          _
        %s275 = sand.u32 %s32, 1
        %s276 = scalar_lea.sflag [#allocation3], %s275
        %s277 = sand.u32 %s32, 1
        %s278 = smul.addr %s277, 8
        %s279 = scalar_lea.vmem [#allocation2], %s278
        %p280 = pneg %p45
        %p281 = pneg %p42
        %p282 = pneg %p66
        %p283 = pneg %p63
        %p284 = pneg %p87
        %p285 = pneg %p84
        %p286 = pneg %p108
        %p287 = pneg %p105
        %p288 = pneg %p129
        %p289 = pneg %p126
        %p290 = pneg %p155
        %p291 = pneg %p152
        %s292 = sand.u32 %s142, 1
        %s293 = scalar_lea.sflag [#allocation4], %s292
        %s294 = sand.u32 %s142, 1
        %s295 = smul.addr %s294, 24
        %s296 = scalar_lea.vmem [#allocation11], %s295
        %s297 = smul.u32 2, %s24
        %s298 = smul.u32 3, %s24
        %v300 = vld [vmem:[%s254] sm:$0xf]
        %v301 = vld [vmem:[%s254 + $0x4] sm:$0xf]
        %v302 = vld [vmem:[#allocation5] sm:$0xf]
        %v303 = vld [vmem:[#allocation5 + $0x4] sm:$0xf]
        %v304 = vld [vmem:[#allocation5 + $0x8] sm:$0xf]
        %v305 = vld [vmem:[#allocation5 + $0xc] sm:$0xf]
        %v306 = vld [vmem:[#allocation5 + $0x10] sm:$0xf]
        %v307 = vld [vmem:[#allocation5 + $0x14] sm:$0xf]
        %v308 = vld [vmem:[#allocation5 + $0x18] sm:$0xf]
        %v309 = vld [vmem:[#allocation5 + $0x1c] sm:$0xf]
        %v310 = vld [vmem:[#allocation7] sm:$0x1]
        %v312 = vlaneseq
        %v313 = vshrl.u32 %v312, 7
        %v314 = vsub.s32 0, %v313
        %v315 = vrot.slane %v310, %v314
        %v319 = vunpack.c.l.b16 %v300
        %v320 = vunpack.c.l.b16 %v301
        %v321 = vpack.c.b16 %v320, %v319
        %v330 = vunpack.c.l.b16 %v302
        %v331 = vunpack.c.l.b16 %v303
        %v332 = vunpack.c.l.b16 %v304
        %v333 = vunpack.c.l.b16 %v305
        %v334 = vunpack.c.l.b16 %v306
        %v335 = vunpack.c.l.b16 %v307
        %v336 = vunpack.c.l.b16 %v308
        %v337 = vunpack.c.l.b16 %v309
        %v338 = vpack.c.b16 %v331, %v330
        %v339 = vpack.c.b16 %v333, %v332
        %v340 = vpack.c.b16 %v335, %v334
        %v341 = vpack.c.b16 %v337, %v336
        %vm346 = vcmask 523264
        %v348 = vsel %vm346, %v321, 0
        %350 = vmatprep.subr.bf16.mxu0 0
        %351 = vmatpush1.bf16.msra.mxu0 %v338
        %352 = vmatprep.subr.bf16.mxu0 0
        %353 = vmatpush1.bf16.msra.mxu0 %v339
        %354 = vmatprep.subr.bf16.mxu0 0
        %355 = vmatpush1.bf16.msra.mxu0 %v340
        %356 = vmatprep.subr.bf16.mxu0 0
        %357 = vmatpush1.bf16.msra.mxu0 %v341
        %358 = vmatprep.subr.bf16.mxu0 0
        %359 = vmatpush1.bf16.msra.mxu0 0
        %360 = vmatprep.subr.bf16.mxu0 0
        %361 = vmatpush1.bf16.msra.mxu0 0
        %362 = vmatprep.subr.bf16.mxu0 0
        %363 = vmatpush1.bf16.msra.mxu0 0
        %364 = vmatprep.subr.bf16.mxu0 0
        %365 = vmatpush1.bf16.msra.mxu0 0
        %366 = vmatprep.subr.bf16.mxu0 0
        %367 = vmatpush1.bf16.msra.mxu0 0
        %368 = vmatprep.subr.bf16.mxu0 0
        %369 = vmatpush1.bf16.msra.mxu0 0
        %370 = vmatprep.subr.bf16.mxu0 0
        %371 = vmatpush1.bf16.msra.mxu0 0
        %372 = vmatprep.subr.bf16.mxu0 0
        %373 = vmatpush1.bf16.msra.mxu0 0
        %374 = vmatprep.subr.bf16.mxu0 0
        %375 = vmatpush1.bf16.msra.mxu0 0
        %376 = vmatprep.subr.bf16.mxu0 0
        %377 = vmatpush1.bf16.msra.mxu0 0
        %378 = vmatprep.subr.bf16.mxu0 0
        %379 = vmatpush1.bf16.msra.mxu0 0
        %380 = vmatprep.subr.bf16.mxu0 0
        %381 = vmatpush1.bf16.msra.mxu0 0
        %382 = vmatprep.mubr.bf16.mxu0 0
        %383 = vmatmul.mubr.bf16.gmra.mrb[0].mxu0 %v348
        %v384 = vpop.f32.mrb[0].mxu0
        %v385 = vadd.f32 %v315, %v384
        %v386 = vpop.f32.mrb[0].mxu0
        %v387 = vpop.f32.mrb[0].mxu0
        %v388 = vadd.f32 %v315, %v387
        %v389 = vpop.f32.mrb[0].mxu0
        %390 = vdwg.mxu0
        %v391 = vld [vmem:[#allocation8] sm:$0x1]
        %vm392 = vcmask 253952
        %393 = vst.msk [vmem:[%s296] sm:$0x1] %vm392, %v391
        %v394 = vld [vmem:[#allocation10] sm:$0xff]
        %v395 = vld [vmem:[#allocation10 + $0x8] sm:$0xff]
        %v396 = vadd.f32 %v385, %v394
        %v397 = vadd.f32 %v388, %v395
        %vm398 = vcmask 261120
        %399 = vst.msk [vmem:[%s296 + $0x1] sm:$0xff] %vm398, %v396
        %400 = vst.msk [vmem:[%s296 + $0x9] sm:$0xff] %vm398, %v397
        %vm401 = vcmask 260096
        %402 = vst.msk [vmem:[%s296 + $0x11] sm:$0x7f] %vm401, 0.0
        %s403 = sand.u32 %s142, 1
        %s404 = scalar_lea.sflag [#allocation4], %s403
        %s405 = sand.u32 %s142, 1
        %s406 = smul.addr %s405, 24
        %s407 = scalar_lea.vmem [#allocation11], %s406
        // Predicated region
        $region61: #{tpu_custom_call.1} parent=39 // pred_check
          %p408 = pneg %p152
        $region62: #{tpu_custom_call.1} parent=39 // pred_check_branch
          %410 = sbr.rel (%p408) target = $region64
        $region63: #{tpu_custom_call.1} parent=39 // pred_region
          %s411 = smul.u32 3, %s24
          %s413 = ssub.s32 384, 384
          %414 = vsyncadd %s404, %s413
          %s415 = smul.addr %s411, 128
          %s416 = scalar_lea.hbm %s5, %s415
          %s417 = sshll.u32 %s407, 4
          %s418 = int_to_ptr.vmem [resolvable:$true] %s417
          %423 = dma.vmem_to_hbm [thread:$0]  %s418, 384, %s416, %s404, 128, 128, 8
        $region64: #{tpu_custom_call.1} parent=39 // pred_fallthru
          _
      $region40: #{tpu_custom_call.1} parent=5 // pred_fallthru
        _
      %p424 = scmp.le.s32.totalorder 2, %s19
      // Predicated region
      $region65: #{tpu_custom_call.1} parent=5 // pred_check
        %p425 = pneg %p424
      $region66: #{tpu_custom_call.1} parent=5 // pred_check_branch
        %427 = sbr.rel (%p425) target = $region68
      $region67: #{tpu_custom_call.1} parent=5 // pred_region
        %s428 = ssub.s32 %s19, 2
        // Predicated region
        $region69: #{tpu_custom_call.1} parent=67 // pred_check
          %p429 = pneg %p158
        $region70: #{tpu_custom_call.1} parent=67 // pred_check_branch
          %431 = sbr.rel (%p429) target = $region72
        $region71: #{tpu_custom_call.1} parent=67 // pred_region
          %s432 = sand.u32 %s143, 1
          %s433 = scalar_lea.sflag [#allocation4], %s432
          %s434 = sand.u32 %s143, 1
          %s435 = smul.addr %s434, 24
          %s436 = scalar_lea.vmem [#allocation11], %s435
          %437 = dma.done %s433, 384
        $region72: #{tpu_custom_call.1} parent=67 // pred_fallthru
          _
      $region68: #{tpu_custom_call.1} parent=5 // pred_fallthru
        _
    $region6: #{tpu_custom_call.1} parent=1 // loop_footer
      %s23 = sadd.s32 1, %s19
    $region7: #{tpu_custom_call.1} parent=1 // loop_footer_branch
      %18 = sbr.rel target = $region3
    $region8: #{tpu_custom_call.1} parent=1 // loop_exit
      _
    %438 = vsyncpa [#allocation3], 1
    %s439 = scalar_lea.sflag [#allocation3], 1
    %440 = vsyncpa %s439, 1
    %441 = vsyncpa [#allocation6], 1
    %442 = vsyncpa [#allocation9], 1
    %443 = vsyncpa [#allocation4], 1
    %s444 = scalar_lea.sflag [#allocation4], 1
    %445 = vsyncpa %s444, 1

</llo_original>
